<compile_context>
chip_gen: v6e
topology: v6e:2x2x1
jax: 0.10.0
libtpu: 0.0.40
codegen_flags: <defaults>
</compile_context>

<pallas_src>
import itertools
import numpy as np

import jax
import jax.numpy as jnp
from jax.experimental import pallas as pl
from jax.experimental.pallas import tpu as pltpu

# Matcher hyper-parameters (module defaults).
COST_CLASS = 2.0
COST_BBOX = 5.0
COST_GIOU = 2.0
ALPHA = 0.25
GAMMA = 2.0  # == 2 -> implemented as a plain square in-kernel (no EUP pow)

LANE = 128


def _matcher_cost_kernel(logits_ref, onehot_ref, pbox_ref, tgeom_ref, cost_ref):
    """One row tile of the (N_pad, T_pad) matching-cost matrix.

    logits_ref : (TILE_N, C_pad)  bf16  raw logits (zero-padded classes)
    onehot_ref : (C_pad, T_pad)   bf16  one_hot(tgt_ids) columns (zeros in padding)
    pbox_ref   : (TILE_N, 4)      f32   pred boxes cxcywh
    tgeom_ref  : (8, T_pad)       f32   target rows [cx, cy, w, h, x0, y0, x1, y1]
    cost_ref   : (TILE_N, T_pad)  f32
    """
    # ---- focal classification cost (single-log form) ----
    # Gather logits first (exact: one-hot is 0/1), then do the transcendental
    # work on the (TILE_N, T_pad) result instead of the full (TILE_N, C) grid.
    lg = jnp.dot(logits_ref[...], onehot_ref[...],
                 preferred_element_type=jnp.float32)          # (TILE_N, T_pad) f32
    pg = jax.nn.sigmoid(lg)
    lp = jnp.log(pg + 1e-8)                                   # single EUP log
    one_m = 1.0 - pg
    # gamma == 2 -> plain squares on the VPU; -log(1-p) == lg - log(p)
    # (softplus identity), so the second log is free.
    neg_cost = (1.0 - ALPHA) * (pg * pg) * (lg - lp)
    pos_cost = ALPHA * (one_m * one_m) * (-lp)
    acc = COST_CLASS * (pos_cost - neg_cost)                  # running accumulator

    pb = pbox_ref[...]                                        # (TILE_N, 4) f32
    tg = tgeom_ref[...]                                       # (8, T_pad) lane-dense rows

    # ---- L1 cdist (p=1), accumulated straight into acc (no full-tile temp) ----
    for k in range(4):
        acc = acc + COST_BBOX * jnp.abs(pb[:, k:k + 1] - tg[k:k + 1, :])

    # ---- generalized IoU cost ----
    px0 = pb[:, 0:1] - 0.5 * pb[:, 2:3]
    py0 = pb[:, 1:2] - 0.5 * pb[:, 3:4]
    px1 = pb[:, 0:1] + 0.5 * pb[:, 2:3]
    py1 = pb[:, 1:2] + 0.5 * pb[:, 3:4]

    tx0 = tg[4:5, :]                                          # (1, T_pad), lane-dense
    ty0 = tg[5:6, :]
    tx1 = tg[6:7, :]
    ty1 = tg[7:8, :]

    area_p = (px1 - px0) * (py1 - py0)                        # (TILE_N, 1)
    area_t = (tx1 - tx0) * (ty1 - ty0)                        # (1, T_pad)

    inter_w = jnp.maximum(jnp.minimum(px1, tx1) - jnp.maximum(px0, tx0), 0.0)
    inter_h = jnp.maximum(jnp.minimum(py1, ty1) - jnp.maximum(py0, ty0), 0.0)
    inter = inter_w * inter_h                                 # (TILE_N, T_pad)
    union = area_p + area_t - inter
    # approx reciprocal runs in the otherwise-idle EUP slot; eps guards the
    # padded / degenerate lanes.
    iou = inter * pl.reciprocal(union + 1e-7, approx=True)

    enc_w = jnp.maximum(jnp.maximum(px1, tx1) - jnp.minimum(px0, tx0), 0.0)
    enc_h = jnp.maximum(jnp.maximum(py1, ty1) - jnp.minimum(py0, ty0), 0.0)
    enc_area = enc_w * enc_h
    giou = iou - (enc_area - union) * pl.reciprocal(enc_area + 1e-7, approx=True)

    acc = acc - COST_GIOU * giou
    cost_ref[...] = acc                                       # single lane-dense store


def _round_up(x, m):
    return ((x + m - 1) // m) * m


def compute_cost_matrix(pred_logits, pred_boxes, tgt_ids, tgt_boxes, *, tile_n=256):
    """pred_logits: (B, Q, C); pred_boxes: (B, Q, 4); tgt_ids: (T,); tgt_boxes: (T, 4)."""
    bs, nq, num_classes = pred_logits.shape
    N = bs * nq
    T = int(tgt_ids.shape[0])

    # Lane-dense axes: pad T (and the class contraction axis) to a full
    # 128-lane multiple so loads, the MXU pass and the output store use full
    # vregs / unmasked vst.
    T_pad = _round_up(max(T, 1), LANE)
    C_pad = _round_up(num_classes, LANE)

    # Row tile: multiple of 16 (bf16 sublane packing). When there are enough
    # rows, cap the tile so the grid has >= 2 steps and v7x's second
    # TensorCore is not idle. 256 x T_pad f32 tiles are small vs VMEM.
    n_rounded = _round_up(max(N, 1), 16)
    tile_n = min(tile_n, n_rounded)
    if n_rounded >= 2 * LANE:
        tile_n = min(tile_n, max(LANE, _round_up((n_rounded + 1) // 2, 16)))
    N_pad = _round_up(N, tile_n)

    # Cast to bf16 BEFORE padding (halves the XLA-side pad/copy traffic);
    # padded class columns are zero.
    logits_bf16 = pred_logits.reshape(N, num_classes).astype(jnp.bfloat16)
    logits_bf16 = jnp.pad(logits_bf16, ((0, N_pad - N), (0, C_pad - num_classes)))

    boxes_flat = pred_boxes.reshape(N, 4).astype(jnp.float32)
    if N_pad > N:
        boxes_flat = jnp.pad(boxes_flat, ((0, N_pad - N), (0, 0)))

    # One-hot gather matrix, built already transposed in bf16 (no XLA
    # transpose). Padded target columns / class rows are all-zero -> gathered
    # logit 0 -> finite focal cost that is sliced off afterwards. bf16 is
    # exact for the 0/1 matrix.
    class_iota = jnp.arange(C_pad, dtype=jnp.int32)[:, None]                # (C_pad, 1)
    onehot_bf16 = (class_iota == tgt_ids.astype(jnp.int32)[None, :]).astype(jnp.bfloat16)
    onehot_bf16 = jnp.pad(onehot_bf16, ((0, 0), (0, T_pad - T)))            # (C_pad, T_pad)

    # Pre-transposed / precomputed target geometry: one lane-dense (8, T_pad)
    # slab [cx, cy, w, h, x0, y0, x1, y1] -> no cross-lane relayouts in-kernel.
    tb = tgt_boxes.astype(jnp.float32)
    if T_pad > T:
        pad_box = jnp.tile(jnp.asarray([[0.5, 0.5, 1.0, 1.0]], jnp.float32),
                           (T_pad - T, 1))  # unit dummy boxes: non-degenerate denoms
        tb = jnp.concatenate([tb, pad_box], axis=0)
    cx, cy, w, h = tb[:, 0], tb[:, 1], tb[:, 2], tb[:, 3]
    tgeom = jnp.stack([cx, cy, w, h,
                       cx - 0.5 * w, cy - 0.5 * h,
                       cx + 0.5 * w, cy + 0.5 * h], axis=0)                 # (8, T_pad)

    grid = (N_pad // tile_n,)
    cost = pl.pallas_call(
        _matcher_cost_kernel,
        out_shape=jax.ShapeDtypeStruct((N_pad, T_pad), jnp.float32),
        grid_spec=pltpu.PrefetchScalarGridSpec(
            num_scalar_prefetch=0,
            grid=grid,
            in_specs=[
                pl.BlockSpec((tile_n, C_pad), lambda i: (i, 0)),   # logits tile
                pl.BlockSpec((C_pad, T_pad), lambda i: (0, 0)),    # one-hot (grid-invariant)
                pl.BlockSpec((tile_n, 4), lambda i: (i, 0)),       # pred boxes tile
                pl.BlockSpec((8, T_pad), lambda i: (0, 0)),        # target geometry
            ],
            out_specs=pl.BlockSpec((tile_n, T_pad), lambda i: (i, 0)),
        ),
        compiler_params=pltpu.CompilerParams(
            dimension_semantics=("parallel",)),
    )(logits_bf16, onehot_bf16, boxes_flat, tgeom)

    return cost[:N, :T].reshape(bs, nq, T)


def _exact_assignment(cost_np):
    """Exact minimum-cost assignment (rows >= cols) via brute force.
    Returns (row_ind, col_ind) like scipy.optimize.linear_sum_assignment."""
    # TODO(synk): linear_sum_assignment is a sequential combinatorial algorithm with
    # no clean Pallas equivalent; it runs on host (exact brute force at demo sizes).
    nq, nt = cost_np.shape
    best_rows, best_cost = None, np.inf
    for rows in itertools.permutations(range(nq), nt):
        c = cost_np[list(rows), np.arange(nt)].sum()
        if c < best_cost:
            best_cost, best_rows = c, rows
    rows = np.asarray(best_rows, dtype=np.int64)
    cols = np.arange(nt, dtype=np.int64)
    order = np.argsort(rows)
    return rows[order], cols[order]


def hungarian_matcher(pred_logits, pred_boxes, targets):
    """Mirror of HungarianMatcher.forward. targets: list of dicts with 'labels', 'boxes'."""
    tgt_ids = jnp.concatenate([t["labels"] for t in targets], axis=0)
    tgt_boxes = jnp.concatenate([t["boxes"] for t in targets], axis=0)
    C = compute_cost_matrix(pred_logits, pred_boxes, tgt_ids, tgt_boxes)
    C = np.asarray(jax.block_until_ready(C))                 # (B, Q, T)

    sizes = [int(t["boxes"].shape[0]) for t in targets]
    indices, start = [], 0
    for i, sz in enumerate(sizes):
        sub = C[i, :, start:start + sz]
        indices.append(_exact_assignment(sub))
        start += sz
    return indices


def _reference_cost(pred_logits, pred_boxes, tgt_ids, tgt_boxes):
    """Pure-JAX reference for the cost matrix (numerics check, mirrors PyTorch)."""
    bs, nq, num_classes = pred_logits.shape
    prob = jax.nn.sigmoid(pred_logits.reshape(-1, num_classes))
    pg = prob[:, tgt_ids]
    neg = (1 - ALPHA) * pg ** GAMMA * -jnp.log(1 - pg + 1e-8)
    pos = ALPHA * (1 - pg) ** GAMMA * -jnp.log(pg + 1e-8)
    cost_class = pos - neg
    pb = pred_boxes.reshape(-1, 4)
    cost_bbox = jnp.abs(pb[:, None, :] - tgt_boxes[None, :, :]).sum(-1)

    def to_xyxy(b):
        cx, cy, w, h = b[:, 0], b[:, 1], b[:, 2], b[:, 3]
        return jnp.stack([cx - w / 2, cy - h / 2, cx + w / 2, cy + h / 2], -1)

    b1, b2 = to_xyxy(pb), to_xyxy(tgt_boxes)
    a1 = (b1[:, 2] - b1[:, 0]) * (b1[:, 3] - b1[:, 1])
    a2 = (b2[:, 2] - b2[:, 0]) * (b2[:, 3] - b2[:, 1])
    lt = jnp.maximum(b1[:, None, :2], b2[None, :, :2])
    rb = jnp.minimum(b1[:, None, 2:], b2[None, :, 2:])
    wh = jnp.clip(rb - lt, 0)
    inter = wh[..., 0] * wh[..., 1]
    union = a1[:, None] + a2[None, :] - inter
    iou = inter / union
    lte = jnp.minimum(b1[:, None, :2], b2[None, :, :2])
    rbe = jnp.maximum(b1[:, None, 2:], b2[None, :, 2:])
    whe = jnp.clip(rbe - lte, 0)
    enc = whe[..., 0] * whe[..., 1]
    giou = iou - (enc - union) / enc
    C = COST_BBOX * cost_bbox + COST_CLASS * cost_class + COST_GIOU * (-giou)
    return C.reshape(bs, nq, -1)


if __name__ == "__main__":
    key = jax.random.PRNGKey(0)
    bs, num_queries, num_classes = 2, 8, 32
    sizes = [3, 3]

    k1, k2, k3, k4 = jax.random.split(key, 4)
    pred_logits = jax.random.normal(k1, (bs, num_queries, num_classes), jnp.float32)
    # cxcywh boxes: centers in (0.25, 0.75), w/h in (0.1, 0.3)
    pc = jax.random.uniform(k2, (bs, num_queries, 2), minval=0.25, maxval=0.75)
    pwh = jax.random.uniform(k2, (bs, num_queries, 2), minval=0.1, maxval=0.3)
    pred_boxes = jnp.concatenate([pc, pwh], axis=-1)

    targets = []
    tks = jax.random.split(k3, bs)
    for i, sz in enumerate(sizes):
        ka, kb = jax.random.split(tks[i])
        labels = jax.random.randint(ka, (sz,), 0, num_classes, dtype=jnp.int32)
        tc = jax.random.uniform(kb, (sz, 2), minval=0.25, maxval=0.75)
        twh = jax.random.uniform(kb, (sz, 2), minval=0.1, maxval=0.3)
        targets.append({"labels": labels, "boxes": jnp.concatenate([tc, twh], axis=-1)})

    # Run the Pallas kernel (cost matrix) + host assignment.
    tgt_ids = jnp.concatenate([t["labels"] for t in targets])
    tgt_boxes = jnp.concatenate([t["boxes"] for t in targets])
    C_kernel = jax.block_until_ready(
        compute_cost_matrix(pred_logits, pred_boxes, tgt_ids, tgt_boxes))

    # Numerics check against a pure-f32 JAX reference. The kernel feeds the
    # MXU gather in bf16, uses the single-log focal identity and approx
    # reciprocals, so tolerances are a bit looser than pure f32 round-off.
    C_ref = _reference_cost(pred_logits, pred_boxes, tgt_ids, tgt_boxes)
    np.testing.assert_allclose(np.asarray(C_kernel), np.asarray(C_ref),
                               rtol=2e-2, atol=2e-2)
    assert np.isfinite(np.asarray(C_kernel)).all()

    indices = hungarian_matcher(pred_logits, pred_boxes, targets)
    assert len(indices) == bs
    for (ri, ci), sz in zip(indices, sizes):
        assert ri.shape == (sz,) and ci.shape == (sz,)
        assert ri.dtype == np.int64 and ci.dtype == np.int64

    # Sanity-check that the assignments also match a reference-cost assignment
    # (small cost perturbations are what actually matter downstream).
    C_ref_np = np.asarray(C_ref)
    start = 0
    for i, ((ri, ci), sz) in enumerate(zip(indices, sizes)):
        ref_ri, ref_ci = _exact_assignment(C_ref_np[i, :, start:start + sz])
        assert np.array_equal(ri, ref_ri) and np.array_equal(ci, ref_ci)
        start += sz

    print("KERNEL_OK")
</pallas_src>

<mosaic_0001>
module attributes {stable_mosaic.version = 11 : i64} {
  func.func @_matcher_cost_kernel(%arg0: i32, %arg1: memref<16x128xbf16, #tpu.memory_space<vmem>>, %arg2: memref<128x128xbf16, #tpu.memory_space<vmem>>, %arg3: memref<16x4xf32, #tpu.memory_space<vmem>>, %arg4: memref<8x128xf32, #tpu.memory_space<vmem>>, %arg5: memref<16x128xf32, #tpu.memory_space<vmem>>) attributes {dimension_semantics = [#tpu.dimension_semantics<parallel>], iteration_bounds = array<i64: 1>, scalar_prefetch = 0 : i64, scratch_operands = 0 : i64, tpu.core_type = #tpu.core_type<tc>, window_params = [{transform_indices = @transform_0, window_bounds = array<i64: 16, 128>}, {pipeline_mode = #tpu.pipeline_mode<synchronous>, transform_indices = @transform_1, window_bounds = array<i64: 128, 128>}, {transform_indices = @transform_2, window_bounds = array<i64: 16, 4>}, {pipeline_mode = #tpu.pipeline_mode<synchronous>, transform_indices = @transform_3, window_bounds = array<i64: 8, 128>}, {transform_indices = @transform_4, window_bounds = array<i64: 16, 128>}]} {
    %c0 = arith.constant 0 : index
    %c0_0 = arith.constant 0 : index
    %0 = vector.load %arg1[%c0, %c0_0] : memref<16x128xbf16, #tpu.memory_space<vmem>>, vector<16x128xbf16>
    %c0_1 = arith.constant 0 : index
    %c0_2 = arith.constant 0 : index
    %1 = vector.load %arg2[%c0_1, %c0_2] : memref<128x128xbf16, #tpu.memory_space<vmem>>, vector<128x128xbf16>
    %cst = arith.constant dense<0.000000e+00> : vector<16x128xf32>
    %2 = tpu.matmul %0, %1, %cst {dimension_numbers = #tpu.dot_dimension_numbers<[1], [0], [0], [1], [0, 0, 1, 1], [], []>} : vector<16x128xbf16>, vector<128x128xbf16>, vector<16x128xf32> -> vector<16x128xf32>
    %3 = arith.negf %2 : vector<16x128xf32>
    %4 = math.exp %3 : vector<16x128xf32>
    %cst_3 = arith.constant 1.000000e+00 : f32
    %5 = vector.broadcast %cst_3 : f32 to vector<16x128xf32>
    %6 = arith.addf %5, %4 : vector<16x128xf32>
    %7 = arith.divf %5, %6 : vector<16x128xf32>
    %cst_4 = arith.constant 9.99999993E-9 : f32
    %8 = vector.broadcast %cst_4 : f32 to vector<16x128xf32>
    %9 = arith.addf %7, %8 : vector<16x128xf32>
    %10 = math.log %9 : vector<16x128xf32>
    %cst_5 = arith.constant 1.000000e+00 : f32
    %11 = vector.broadcast %cst_5 : f32 to vector<16x128xf32>
    %12 = arith.subf %11, %7 : vector<16x128xf32>
    %13 = arith.mulf %7, %7 : vector<16x128xf32>
    %cst_6 = arith.constant 7.500000e-01 : f32
    %14 = vector.broadcast %cst_6 : f32 to vector<16x128xf32>
    %15 = arith.mulf %14, %13 : vector<16x128xf32>
    %16 = arith.subf %2, %10 : vector<16x128xf32>
    %17 = arith.mulf %15, %16 : vector<16x128xf32>
    %18 = arith.mulf %12, %12 : vector<16x128xf32>
    %cst_7 = arith.constant 2.500000e-01 : f32
    %19 = vector.broadcast %cst_7 : f32 to vector<16x128xf32>
    %20 = arith.mulf %19, %18 : vector<16x128xf32>
    %cst_8 = arith.constant 0.000000e+00 : f32
    %21 = vector.broadcast %cst_8 : f32 to vector<16x128xf32>
    %22 = arith.subf %21, %10 : vector<16x128xf32>
    %23 = arith.mulf %20, %22 : vector<16x128xf32>
    %24 = arith.subf %23, %17 : vector<16x128xf32>
    %cst_9 = arith.constant 2.000000e+00 : f32
    %25 = vector.broadcast %cst_9 : f32 to vector<16x128xf32>
    %26 = arith.mulf %25, %24 : vector<16x128xf32>
    %c0_10 = arith.constant 0 : index
    %c0_11 = arith.constant 0 : index
    %27 = vector.load %arg3[%c0_10, %c0_11] : memref<16x4xf32, #tpu.memory_space<vmem>>, vector<16x4xf32>
    %c0_12 = arith.constant 0 : index
    %c0_13 = arith.constant 0 : index
    %28 = vector.load %arg4[%c0_12, %c0_13] : memref<8x128xf32, #tpu.memory_space<vmem>>, vector<8x128xf32>
    %29 = vector.extract_strided_slice %27 {offsets = [0, 0], sizes = [16, 1], strides = [1, 1]} : vector<16x4xf32> to vector<16x1xf32>
    %30 = vector.extract_strided_slice %28 {offsets = [0, 0], sizes = [1, 128], strides = [1, 1]} : vector<8x128xf32> to vector<1x128xf32>
    %31 = vector.broadcast %29 : vector<16x1xf32> to vector<16x128xf32>
    %32 = vector.broadcast %30 : vector<1x128xf32> to vector<16x128xf32>
    %33 = arith.subf %31, %32 : vector<16x128xf32>
    %34 = math.absf %33 : vector<16x128xf32>
    %cst_14 = arith.constant 5.000000e+00 : f32
    %35 = vector.broadcast %cst_14 : f32 to vector<16x128xf32>
    %36 = arith.mulf %35, %34 : vector<16x128xf32>
    %37 = arith.addf %26, %36 : vector<16x128xf32>
    %38 = vector.extract_strided_slice %27 {offsets = [0, 1], sizes = [16, 1], strides = [1, 1]} : vector<16x4xf32> to vector<16x1xf32>
    %39 = vector.extract_strided_slice %28 {offsets = [1, 0], sizes = [1, 128], strides = [1, 1]} : vector<8x128xf32> to vector<1x128xf32>
    %40 = vector.broadcast %38 : vector<16x1xf32> to vector<16x128xf32>
    %41 = vector.broadcast %39 : vector<1x128xf32> to vector<16x128xf32>
    %42 = arith.subf %40, %41 : vector<16x128xf32>
    %43 = math.absf %42 : vector<16x128xf32>
    %cst_15 = arith.constant 5.000000e+00 : f32
    %44 = vector.broadcast %cst_15 : f32 to vector<16x128xf32>
    %45 = arith.mulf %44, %43 : vector<16x128xf32>
    %46 = arith.addf %37, %45 : vector<16x128xf32>
    %47 = vector.extract_strided_slice %27 {offsets = [0, 2], sizes = [16, 1], strides = [1, 1]} : vector<16x4xf32> to vector<16x1xf32>
    %48 = vector.extract_strided_slice %28 {offsets = [2, 0], sizes = [1, 128], strides = [1, 1]} : vector<8x128xf32> to vector<1x128xf32>
    %49 = vector.broadcast %47 : vector<16x1xf32> to vector<16x128xf32>
    %50 = vector.broadcast %48 : vector<1x128xf32> to vector<16x128xf32>
    %51 = arith.subf %49, %50 : vector<16x128xf32>
    %52 = math.absf %51 : vector<16x128xf32>
    %cst_16 = arith.constant 5.000000e+00 : f32
    %53 = vector.broadcast %cst_16 : f32 to vector<16x128xf32>
    %54 = arith.mulf %53, %52 : vector<16x128xf32>
    %55 = arith.addf %46, %54 : vector<16x128xf32>
    %56 = vector.extract_strided_slice %27 {offsets = [0, 3], sizes = [16, 1], strides = [1, 1]} : vector<16x4xf32> to vector<16x1xf32>
    %57 = vector.extract_strided_slice %28 {offsets = [3, 0], sizes = [1, 128], strides = [1, 1]} : vector<8x128xf32> to vector<1x128xf32>
    %58 = vector.broadcast %56 : vector<16x1xf32> to vector<16x128xf32>
    %59 = vector.broadcast %57 : vector<1x128xf32> to vector<16x128xf32>
    %60 = arith.subf %58, %59 : vector<16x128xf32>
    %61 = math.absf %60 : vector<16x128xf32>
    %cst_17 = arith.constant 5.000000e+00 : f32
    %62 = vector.broadcast %cst_17 : f32 to vector<16x128xf32>
    %63 = arith.mulf %62, %61 : vector<16x128xf32>
    %64 = arith.addf %55, %63 : vector<16x128xf32>
    %65 = vector.extract_strided_slice %27 {offsets = [0, 0], sizes = [16, 1], strides = [1, 1]} : vector<16x4xf32> to vector<16x1xf32>
    %66 = vector.extract_strided_slice %27 {offsets = [0, 2], sizes = [16, 1], strides = [1, 1]} : vector<16x4xf32> to vector<16x1xf32>
    %cst_18 = arith.constant 5.000000e-01 : f32
    %67 = vector.broadcast %cst_18 : f32 to vector<16x1xf32>
    %68 = arith.mulf %67, %66 : vector<16x1xf32>
    %69 = arith.subf %65, %68 : vector<16x1xf32>
    %70 = vector.extract_strided_slice %27 {offsets = [0, 1], sizes = [16, 1], strides = [1, 1]} : vector<16x4xf32> to vector<16x1xf32>
    %71 = vector.extract_strided_slice %27 {offsets = [0, 3], sizes = [16, 1], strides = [1, 1]} : vector<16x4xf32> to vector<16x1xf32>
    %cst_19 = arith.constant 5.000000e-01 : f32
    %72 = vector.broadcast %cst_19 : f32 to vector<16x1xf32>
    %73 = arith.mulf %72, %71 : vector<16x1xf32>
    %74 = arith.subf %70, %73 : vector<16x1xf32>
    %75 = vector.extract_strided_slice %27 {offsets = [0, 0], sizes = [16, 1], strides = [1, 1]} : vector<16x4xf32> to vector<16x1xf32>
    %76 = vector.extract_strided_slice %27 {offsets = [0, 2], sizes = [16, 1], strides = [1, 1]} : vector<16x4xf32> to vector<16x1xf32>
    %cst_20 = arith.constant 5.000000e-01 : f32
    %77 = vector.broadcast %cst_20 : f32 to vector<16x1xf32>
    %78 = arith.mulf %77, %76 : vector<16x1xf32>
    %79 = arith.addf %75, %78 : vector<16x1xf32>
    %80 = vector.extract_strided_slice %27 {offsets = [0, 1], sizes = [16, 1], strides = [1, 1]} : vector<16x4xf32> to vector<16x1xf32>
    %81 = vector.extract_strided_slice %27 {offsets = [0, 3], sizes = [16, 1], strides = [1, 1]} : vector<16x4xf32> to vector<16x1xf32>
    %cst_21 = arith.constant 5.000000e-01 : f32
    %82 = vector.broadcast %cst_21 : f32 to vector<16x1xf32>
    %83 = arith.mulf %82, %81 : vector<16x1xf32>
    %84 = arith.addf %80, %83 : vector<16x1xf32>
    %85 = vector.extract_strided_slice %28 {offsets = [4, 0], sizes = [1, 128], strides = [1, 1]} : vector<8x128xf32> to vector<1x128xf32>
    %86 = vector.extract_strided_slice %28 {offsets = [5, 0], sizes = [1, 128], strides = [1, 1]} : vector<8x128xf32> to vector<1x128xf32>
    %87 = vector.extract_strided_slice %28 {offsets = [6, 0], sizes = [1, 128], strides = [1, 1]} : vector<8x128xf32> to vector<1x128xf32>
    %88 = vector.extract_strided_slice %28 {offsets = [7, 0], sizes = [1, 128], strides = [1, 1]} : vector<8x128xf32> to vector<1x128xf32>
    %89 = arith.subf %79, %69 : vector<16x1xf32>
    %90 = arith.subf %84, %74 : vector<16x1xf32>
    %91 = arith.mulf %89, %90 : vector<16x1xf32>
    %92 = arith.subf %87, %85 : vector<1x128xf32>
    %93 = arith.subf %88, %86 : vector<1x128xf32>
    %94 = arith.mulf %92, %93 : vector<1x128xf32>
    %95 = vector.broadcast %79 : vector<16x1xf32> to vector<16x128xf32>
    %96 = vector.broadcast %87 : vector<1x128xf32> to vector<16x128xf32>
    %97 = arith.minimumf %95, %96 : vector<16x128xf32>
    %98 = vector.broadcast %69 : vector<16x1xf32> to vector<16x128xf32>
    %99 = vector.broadcast %85 : vector<1x128xf32> to vector<16x128xf32>
    %100 = arith.maximumf %98, %99 : vector<16x128xf32>
    %101 = arith.subf %97, %100 : vector<16x128xf32>
    %cst_22 = arith.constant 0.000000e+00 : f32
    %102 = vector.broadcast %cst_22 : f32 to vector<16x128xf32>
    %103 = arith.maximumf %101, %102 : vector<16x128xf32>
    %104 = vector.broadcast %84 : vector<16x1xf32> to vector<16x128xf32>
    %105 = vector.broadcast %88 : vector<1x128xf32> to vector<16x128xf32>
    %106 = arith.minimumf %104, %105 : vector<16x128xf32>
    %107 = vector.broadcast %74 : vector<16x1xf32> to vector<16x128xf32>
    %108 = vector.broadcast %86 : vector<1x128xf32> to vector<16x128xf32>
    %109 = arith.maximumf %107, %108 : vector<16x128xf32>
    %110 = arith.subf %106, %109 : vector<16x128xf32>
    %cst_23 = arith.constant 0.000000e+00 : f32
    %111 = vector.broadcast %cst_23 : f32 to vector<16x128xf32>
    %112 = arith.maximumf %110, %111 : vector<16x128xf32>
    %113 = arith.mulf %103, %112 : vector<16x128xf32>
    %114 = vector.broadcast %91 : vector<16x1xf32> to vector<16x128xf32>
    %115 = vector.broadcast %94 : vector<1x128xf32> to vector<16x128xf32>
    %116 = arith.addf %114, %115 : vector<16x128xf32>
    %117 = arith.subf %116, %113 : vector<16x128xf32>
    %cst_24 = arith.constant 1.000000e-07 : f32
    %118 = vector.broadcast %cst_24 : f32 to vector<16x128xf32>
    %119 = arith.addf %117, %118 : vector<16x128xf32>
    %120 = tpu.reciprocal %119 {approx = true} : vector<16x128xf32> -> vector<16x128xf32>
    %121 = arith.mulf %113, %120 : vector<16x128xf32>
    %122 = vector.broadcast %79 : vector<16x1xf32> to vector<16x128xf32>
    %123 = vector.broadcast %87 : vector<1x128xf32> to vector<16x128xf32>
    %124 = arith.maximumf %122, %123 : vector<16x128xf32>
    %125 = vector.broadcast %69 : vector<16x1xf32> to vector<16x128xf32>
    %126 = vector.broadcast %85 : vector<1x128xf32> to vector<16x128xf32>
    %127 = arith.minimumf %125, %126 : vector<16x128xf32>
    %128 = arith.subf %124, %127 : vector<16x128xf32>
    %cst_25 = arith.constant 0.000000e+00 : f32
    %129 = vector.broadcast %cst_25 : f32 to vector<16x128xf32>
    %130 = arith.maximumf %128, %129 : vector<16x128xf32>
    %131 = vector.broadcast %84 : vector<16x1xf32> to vector<16x128xf32>
    %132 = vector.broadcast %88 : vector<1x128xf32> to vector<16x128xf32>
    %133 = arith.maximumf %131, %132 : vector<16x128xf32>
    %134 = vector.broadcast %74 : vector<16x1xf32> to vector<16x128xf32>
    %135 = vector.broadcast %86 : vector<1x128xf32> to vector<16x128xf32>
    %136 = arith.minimumf %134, %135 : vector<16x128xf32>
    %137 = arith.subf %133, %136 : vector<16x128xf32>
    %cst_26 = arith.constant 0.000000e+00 : f32
    %138 = vector.broadcast %cst_26 : f32 to vector<16x128xf32>
    %139 = arith.maximumf %137, %138 : vector<16x128xf32>
    %140 = arith.mulf %130, %139 : vector<16x128xf32>
    %141 = arith.subf %140, %117 : vector<16x128xf32>
    %cst_27 = arith.constant 1.000000e-07 : f32
    %142 = vector.broadcast %cst_27 : f32 to vector<16x128xf32>
    %143 = arith.addf %140, %142 : vector<16x128xf32>
    %144 = tpu.reciprocal %143 {approx = true} : vector<16x128xf32> -> vector<16x128xf32>
    %145 = arith.mulf %141, %144 : vector<16x128xf32>
    %146 = arith.subf %121, %145 : vector<16x128xf32>
    %cst_28 = arith.constant 2.000000e+00 : f32
    %147 = vector.broadcast %cst_28 : f32 to vector<16x128xf32>
    %148 = arith.mulf %147, %146 : vector<16x128xf32>
    %149 = arith.subf %64, %148 : vector<16x128xf32>
    %c0_29 = arith.constant 0 : index
    %c0_30 = arith.constant 0 : index
    %150 = vector.load %arg5[%c0_29, %c0_30] : memref<16x128xf32, #tpu.memory_space<vmem>>, vector<16x128xf32>
    tpu.vector_store %arg5[%c0_29, %c0_30], %149 {strides = array<i32>} : memref<16x128xf32, #tpu.memory_space<vmem>>, vector<16x128xf32>,
    return
  }
  func.func @transform_0(%arg0: i32) -> (i32, i32) {
    %c0_i32 = arith.constant 0 : i32
    %c0_i32_0 = arith.constant 0 : i32
    return %arg0, %c0_i32 : i32, i32
  }
  func.func @transform_1(%arg0: i32) -> (i32, i32) {
    %c0_i32 = arith.constant 0 : i32
    %c0_i32_0 = arith.constant 0 : i32
    %c0_i32_1 = arith.constant 0 : i32
    return %c0_i32, %c0_i32_0 : i32, i32
  }
  func.func @transform_2(%arg0: i32) -> (i32, i32) {
    %c0_i32 = arith.constant 0 : i32
    %c0_i32_0 = arith.constant 0 : i32
    return %arg0, %c0_i32 : i32, i32
  }
  func.func @transform_3(%arg0: i32) -> (i32, i32) {
    %c0_i32 = arith.constant 0 : i32
    %c0_i32_0 = arith.constant 0 : i32
    %c0_i32_1 = arith.constant 0 : i32
    return %c0_i32, %c0_i32_0 : i32, i32
  }
  func.func @transform_4(%arg0: i32) -> (i32, i32) {
    %c0_i32 = arith.constant 0 : i32
    %c0_i32_0 = arith.constant 0 : i32
    return %arg0, %c0_i32 : i32, i32
  }
}

</mosaic_0001>

<llo_original>
// kernel: tpu_custom_call.1
$region0: #{tpu_custom_call.1}
  #allocation0 [shape = 'u32[]', space=smem, size = 0x4, offset = 0x4, fixed_abs, tag = 'smem constant byte address 0x4 - core index']
  #allocation1 [shape = 'u32[144,128]{1,0:T(1,128)}', space=vmem, size = 0x12000, scoped, tag = 'internal scratch']
  %s0 = inlined_call_operand.vmem [shape: bf16[16,128], index: 0, kind: input, shape index: {}]
  %s1 = inlined_call_operand.hbm [shape: bf16[128,128], index: 1, kind: input, shape index: {}]
  %s2 = inlined_call_operand.vmem [shape: f32[16,4], index: 2, kind: input, shape index: {}]
  %s3 = inlined_call_operand.vmem [shape: f32[8,128], index: 3, kind: input, shape index: {}]
  %s4 = inlined_call_operand.hbm [shape: f32[16,128], index: 4, kind: output, shape index: {}]
  %s5 = sld [smem:[#allocation0]]
  $region30: #{tpu_custom_call.1} parent=0
    _
  %s7 = ssub.s32 1, %s5
  %s8 = scalar_select 0, %s7, %s5
  $region1: #{tpu_custom_call.1} parent=0
    #allocation2 [shape = 'u8[32768]{0}', space=vmem, size = 0x8000, scoped, tag = 'input window, operand 1, single buffered']
    #allocation3 [shape = 's32[1]{0}', space=sflag, size = 0x4, scoped, tag = 'scoped memory for tpu_custom_call.1']
    #allocation4 [shape = 's32[1]{0}', space=sflag, size = 0x4, scoped, tag = 'scoped memory for tpu_custom_call.1']
    #allocation5 [shape = 'u8[8192]{0}', space=vmem, size = 0x2000, scoped, tag = 'output window, operand 0, single buffered']
    %9 = vsyncpa [#allocation3], 0
    %10 = vsyncpa [#allocation4], 0
    // Predicated region
    $region2: #{tpu_custom_call.1} parent=1 // pred_check
      _
    $region3: #{tpu_custom_call.1} parent=1 // pred_check_branch
      %12 = sbr.rel (0) target = $region5
    $region4: #{tpu_custom_call.1} parent=1 // pred_region
      _
    $region5: #{tpu_custom_call.1} parent=1 // pred_fallthru
      _
    // Predicated region
    $region6: #{tpu_custom_call.1} parent=1 // pred_check
      _
    $region7: #{tpu_custom_call.1} parent=1 // pred_check_branch
      %14 = sbr.rel (0) target = $region9
    $region8: #{tpu_custom_call.1} parent=1 // pred_region
      %s16 = ssub.s32 1024, 1024
      %17 = vsyncadd [#allocation3], %s16
      %s18 = sshll.u32 [#allocation2], 4
      %s19 = int_to_ptr.vmem [resolvable:$true] %s18
      %24 = dma.hbm_to_vmem [thread:$0]  %s1, 1024, %s19, [#allocation3], 64, 64, 4
    $region9: #{tpu_custom_call.1} parent=1 // pred_fallthru
      _
    // Predicated region
    $region10: #{tpu_custom_call.1} parent=1 // pred_check
      _
    $region11: #{tpu_custom_call.1} parent=1 // pred_check_branch
      %26 = sbr.rel (0) target = $region13
    $region12: #{tpu_custom_call.1} parent=1 // pred_region
      _
    $region13: #{tpu_custom_call.1} parent=1 // pred_fallthru
      _
    // Predicated region
    $region14: #{tpu_custom_call.1} parent=1 // pred_check
      _
    $region15: #{tpu_custom_call.1} parent=1 // pred_check_branch
      %28 = sbr.rel (0) target = $region17
    $region16: #{tpu_custom_call.1} parent=1 // pred_region
      _
    $region17: #{tpu_custom_call.1} parent=1 // pred_fallthru
      _
    // Predicated region
    $region18: #{tpu_custom_call.1} parent=1 // pred_check
      _
    $region19: #{tpu_custom_call.1} parent=1 // pred_check_branch
      %30 = sbr.rel (0) target = $region21
    $region20: #{tpu_custom_call.1} parent=1 // pred_region
      %31 = dma.done [#allocation3], 1024
    $region21: #{tpu_custom_call.1} parent=1 // pred_fallthru
      _
    %v33 = vld [vmem:[%s0] sm:$0xf]
    %v34 = vld [vmem:[%s0 + $0x4] sm:$0xf]
    %v35 = vld [vmem:[#allocation2] sm:$0xf]
    %v36 = vld [vmem:[#allocation2 + $0x4] sm:$0xf]
    %v37 = vld [vmem:[#allocation2 + $0x8] sm:$0xf]
    %v38 = vld [vmem:[#allocation2 + $0xc] sm:$0xf]
    %v39 = vld [vmem:[#allocation2 + $0x10] sm:$0xf]
    %v40 = vld [vmem:[#allocation2 + $0x14] sm:$0xf]
    %v41 = vld [vmem:[#allocation2 + $0x18] sm:$0xf]
    %v42 = vld [vmem:[#allocation2 + $0x1c] sm:$0xf]
    %v43 = vld [vmem:[#allocation2 + $0x20] sm:$0xf]
    %v44 = vld [vmem:[#allocation2 + $0x24] sm:$0xf]
    %v45 = vld [vmem:[#allocation2 + $0x28] sm:$0xf]
    %v46 = vld [vmem:[#allocation2 + $0x2c] sm:$0xf]
    %v47 = vld [vmem:[#allocation2 + $0x30] sm:$0xf]
    %v48 = vld [vmem:[#allocation2 + $0x34] sm:$0xf]
    %v49 = vld [vmem:[#allocation2 + $0x38] sm:$0xf]
    %v50 = vld [vmem:[#allocation2 + $0x3c] sm:$0xf]
    %v53 = vunpack.c.l.b16 %v33
    %v54 = vunpack.c.l.b16 %v34
    %v55 = vpack.c.b16 %v54, %v53
    %v73 = vunpack.c.l.b16 %v35
    %v74 = vunpack.c.l.b16 %v36
    %v75 = vunpack.c.l.b16 %v37
    %v76 = vunpack.c.l.b16 %v38
    %v77 = vunpack.c.l.b16 %v39
    %v78 = vunpack.c.l.b16 %v40
    %v79 = vunpack.c.l.b16 %v41
    %v80 = vunpack.c.l.b16 %v42
    %v81 = vunpack.c.l.b16 %v43
    %v82 = vunpack.c.l.b16 %v44
    %v83 = vunpack.c.l.b16 %v45
    %v84 = vunpack.c.l.b16 %v46
    %v85 = vunpack.c.l.b16 %v47
    %v86 = vunpack.c.l.b16 %v48
    %v87 = vunpack.c.l.b16 %v49
    %v88 = vunpack.c.l.b16 %v50
    %v89 = vpack.c.b16 %v74, %v73
    %v90 = vpack.c.b16 %v76, %v75
    %v91 = vpack.c.b16 %v78, %v77
    %v92 = vpack.c.b16 %v80, %v79
    %v93 = vpack.c.b16 %v82, %v81
    %v94 = vpack.c.b16 %v84, %v83
    %v95 = vpack.c.b16 %v86, %v85
    %v96 = vpack.c.b16 %v88, %v87
    %105 = vmatprep.subr.bf16.mxu0 0
    %106 = vmatpush1.bf16.msra.mxu0 %v96
    %107 = vmatprep.subr.bf16.mxu0 0
    %108 = vmatpush1.bf16.msra.mxu0 %v95
    %109 = vmatprep.subr.bf16.mxu0 0
    %110 = vmatpush1.bf16.msra.mxu0 %v94
    %111 = vmatprep.subr.bf16.mxu0 0
    %112 = vmatpush1.bf16.msra.mxu0 %v93
    %113 = vmatprep.subr.bf16.mxu0 0
    %114 = vmatpush1.bf16.msra.mxu0 %v92
    %115 = vmatprep.subr.bf16.mxu0 0
    %116 = vmatpush1.bf16.msra.mxu0 %v91
    %117 = vmatprep.subr.bf16.mxu0 0
    %118 = vmatpush1.bf16.msra.mxu0 %v90
    %119 = vmatprep.subr.bf16.mxu0 0
    %120 = vmatpush1.bf16.msra.mxu0 %v89
    %121 = vmatprep.subr.bf16.mxu0 0
    %122 = vmatpush2.bf16.msra.mxu0 0
    %123 = vmatprep.subr.bf16.mxu0 0
    %124 = vmatpush2.bf16.msra.mxu0 0
    %125 = vmatprep.subr.bf16.mxu0 0
    %126 = vmatpush2.bf16.msra.mxu0 0
    %127 = vmatprep.subr.bf16.mxu0 0
    %128 = vmatpush2.bf16.msra.mxu0 0
    %129 = vmatprep.subr.bf16.mxu0 0
    %130 = vmatpush2.bf16.msra.mxu0 0
    %131 = vmatprep.subr.bf16.mxu0 0
    %132 = vmatpush2.bf16.msra.mxu0 0
    %133 = vmatprep.subr.bf16.mxu0 0
    %134 = vmatpush2.bf16.msra.mxu0 0
    %135 = vmatprep.subr.bf16.mxu0 0
    %136 = vmatpush2.bf16.msra.mxu0 0
    %137 = vmatprep.mubr.bf16.mxu0 0
    %138 = vmatmul.mubr.bf16.gmra.mxu0 %v55
    %v139 = vpop.f32.mrf.mxu0
    %v140 = vadd.f32 0.0, %v139
    %v141 = vpop.f32.mrf.mxu0
    %v142 = vpop.f32.mrf.mxu0
    %v143 = vadd.f32 0.0, %v142
    %v144 = vpop.f32.mrf.mxu0
    %145 = vdwg.mxu0
    %v146 = vxor.u32 %v140, 2147483648
    %v147 = vxor.u32 %v143, 2147483648
    %v148 = vmul.f32 %v146, 1.442695
    %v149 = vpow.pop %v148
    %v150 = vmul.f32 %v147, 1.442695
    %v151 = vpow.pop %v150
    %v152 = vadd.f32 %v149, 1.0
    %v153 = vadd.f32 %v151, 1.0
    %v154 = vrcp.pop %v152
    %v155 = vmul.f32 1.0, %v154
    %v156 = vrcp.pop %v153
    %v157 = vmul.f32 1.0, %v156
    %v158 = vadd.f32 %v155, 1e-08
    %v159 = vadd.f32 %v157, 1e-08
    %v160 = vlog2.pop %v158
    %v161 = vmul.f32 %v160, 0.6931472
    %v162 = vlog2.pop %v159
    %v163 = vmul.f32 %v162, 0.6931472
    %v164 = vsub.f32 1.0, %v155
    %v165 = vsub.f32 1.0, %v157
    %v166 = vmul.f32 %v155, %v155
    %v167 = vmul.f32 %v157, %v157
    %v168 = vmul.f32 %v166, 0.75
    %v169 = vmul.f32 %v167, 0.75
    %v170 = vsub.f32 %v140, %v161
    %v171 = vsub.f32 %v143, %v163
    %v172 = vmul.f32 %v168, %v170
    %v173 = vmul.f32 %v169, %v171
    %v174 = vmul.f32 %v164, %v164
    %v175 = vmul.f32 %v165, %v165
    %v176 = vmul.f32 %v174, 0.25
    %v177 = vmul.f32 %v175, 0.25
    %v178 = vsub.f32 0.0, %v161
    %v179 = vsub.f32 0.0, %v163
    %v180 = vmul.f32 %v176, %v178
    %v181 = vmul.f32 %v177, %v179
    %v182 = vsub.f32 %v180, %v172
    %v183 = vsub.f32 %v181, %v173
    %v184 = vmul.f32 %v182, 2.0
    %v185 = vmul.f32 %v183, 2.0
    %v186 = vld [vmem:[%s2] sm:$0xff]
    %v187 = vld [vmem:[%s2 + $0x8] sm:$0xff]
    %v188 = vld [vmem:[%s3] sm:$0xff]
    %190 = vset.pattern.permute.xlu0 0
    %191 = vperm.xlu0 %190, %v186
    %v192 = vpop.permute.xlu0 %191
    %195 = vset.pattern.permute.xlu0 0
    %196 = vperm.xlu0 %195, %v187
    %v197 = vpop.permute.xlu0 %196
    %v199 = vlaneseq
    %v200 = vshrl.u32 %v199, 7
    %v201 = vsub.s32 0, %v200
    %v202 = vrot.slane %v188, %v201
    %v203 = vsub.f32 %v192, %v202
    %v204 = vsub.f32 %v197, %v202
    %v205 = vand.u32 2147483647, %v203
    %v206 = vand.u32 2147483647, %v204
    %v207 = vmul.f32 %v205, 5.0
    %v208 = vmul.f32 %v206, 5.0
    %v209 = vadd.f32 %v184, %v207
    %v210 = vadd.f32 %v185, %v208
    %211 = vset.pattern.permute.xlu0 1
    %212 = vperm.xlu0 %211, %v186
    %v213 = vpop.permute.xlu0 %212
    %215 = vset.pattern.permute.xlu0 1
    %216 = vperm.xlu0 %215, %v187
    %v217 = vpop.permute.xlu0 %216
    %v219 = vlaneseq
    %v220 = vshrl.u32 %v219, 7
    %v221 = vsub.s32 1, %v220
    %v222 = vrot.slane %v188, %v221
    %v223 = vsub.f32 %v213, %v222
    %v224 = vsub.f32 %v217, %v222
    %v225 = vand.u32 2147483647, %v223
    %v226 = vand.u32 2147483647, %v224
    %v227 = vmul.f32 %v225, 5.0
    %v228 = vmul.f32 %v226, 5.0
    %v229 = vadd.f32 %v209, %v227
    %v230 = vadd.f32 %v210, %v228
    %231 = vset.pattern.permute.xlu0 2
    %232 = vperm.xlu0 %231, %v186
    %v233 = vpop.permute.xlu0 %232
    %235 = vset.pattern.permute.xlu0 2
    %236 = vperm.xlu0 %235, %v187
    %v237 = vpop.permute.xlu0 %236
    %v239 = vlaneseq
    %v240 = vshrl.u32 %v239, 7
    %v241 = vsub.s32 2, %v240
    %v242 = vrot.slane %v188, %v241
    %v243 = vsub.f32 %v233, %v242
    %v244 = vsub.f32 %v237, %v242
    %v245 = vand.u32 2147483647, %v243
    %v246 = vand.u32 2147483647, %v244
    %v247 = vmul.f32 %v245, 5.0
    %v248 = vmul.f32 %v246, 5.0
    %v249 = vadd.f32 %v229, %v247
    %v250 = vadd.f32 %v230, %v248
    %251 = vset.pattern.permute.xlu0 3
    %252 = vperm.xlu0 %251, %v186
    %v253 = vpop.permute.xlu0 %252
    %255 = vset.pattern.permute.xlu0 3
    %256 = vperm.xlu0 %255, %v187
    %v257 = vpop.permute.xlu0 %256
    %v259 = vlaneseq
    %v260 = vshrl.u32 %v259, 7
    %v261 = vsub.s32 3, %v260
    %v262 = vrot.slane %v188, %v261
    %v263 = vsub.f32 %v253, %v262
    %v264 = vsub.f32 %v257, %v262
    %v265 = vand.u32 2147483647, %v263
    %v266 = vand.u32 2147483647, %v264
    %v267 = vmul.f32 %v265, 5.0
    %v268 = vmul.f32 %v266, 5.0
    %v269 = vadd.f32 %v249, %v267
    %v270 = vadd.f32 %v250, %v268
    %v271 = vmul.f32 %v186, 0.5
    %v272 = vmul.f32 %v187, 0.5
    %275 = vrot.lane.b32.xlu0 %v271, 126
    %v276 = vpop.permute.xlu0 %275
    %277 = vrot.lane.b32.xlu0 %v272, 126
    %v278 = vpop.permute.xlu0 %277
    %v281 = vsub.f32 %v186, %v276
    %v282 = vsub.f32 %v187, %v278
    %v283 = vadd.f32 %v186, %v276
    %v284 = vadd.f32 %v187, %v278
    %v285 = vsub.f32 %v283, %v281
    %v286 = vsub.f32 %v284, %v282
    %289 = vrot.lane.b32.xlu0 %v285, 127
    %v290 = vpop.permute.xlu0 %289
    %291 = vrot.lane.b32.xlu0 %v286, 127
    %v292 = vpop.permute.xlu0 %291
    %v295 = vmul.f32 %v285, %v290
    %v296 = vmul.f32 %v286, %v292
    %v298 = vrot.slane %v188, 6
    %v300 = vsub.f32 %v188, %v298
    %v302 = vrot.slane %v300, 1
    %v304 = vmul.f32 %v300, %v302
    %306 = vset.pattern.permute.xlu0 0
    %307 = vperm.xlu0 %306, %v283
    %v308 = vpop.permute.xlu0 %307
    %311 = vset.pattern.permute.xlu0 0
    %312 = vperm.xlu0 %311, %v284
    %v313 = vpop.permute.xlu0 %312
    %v315 = vlaneseq
    %v316 = vshrl.u32 %v315, 7
    %v317 = vsub.s32 6, %v316
    %v318 = vrot.slane %v188, %v317
    %v319 = vmin.f32 %v308, %v318
    %v320 = vmin.f32 %v313, %v318
    %322 = vset.pattern.permute.xlu0 0
    %323 = vperm.xlu0 %322, %v281
    %v324 = vpop.permute.xlu0 %323
    %327 = vset.pattern.permute.xlu0 0
    %328 = vperm.xlu0 %327, %v282
    %v329 = vpop.permute.xlu0 %328
    %v331 = vlaneseq
    %v332 = vshrl.u32 %v331, 7
    %v333 = vsub.s32 4, %v332
    %v334 = vrot.slane %v188, %v333
    %v335 = vmax.f32 %v324, %v334
    %v336 = vmax.f32 %v329, %v334
    %v337 = vsub.f32 %v319, %v335
    %v338 = vsub.f32 %v320, %v336
    %v339 = vmax.f32 %v337, 0.0
    %v340 = vmax.f32 %v338, 0.0
    %341 = vset.pattern.permute.xlu0 1
    %342 = vperm.xlu0 %341, %v283
    %v343 = vpop.permute.xlu0 %342
    %345 = vset.pattern.permute.xlu0 1
    %346 = vperm.xlu0 %345, %v284
    %v347 = vpop.permute.xlu0 %346
    %v349 = vlaneseq
    %v350 = vshrl.u32 %v349, 7
    %v351 = vsub.s32 7, %v350
    %v352 = vrot.slane %v188, %v351
    %v353 = vmin.f32 %v343, %v352
    %v354 = vmin.f32 %v347, %v352
    %355 = vset.pattern.permute.xlu0 1
    %356 = vperm.xlu0 %355, %v281
    %v357 = vpop.permute.xlu0 %356
    %359 = vset.pattern.permute.xlu0 1
    %360 = vperm.xlu0 %359, %v282
    %v361 = vpop.permute.xlu0 %360
    %v363 = vlaneseq
    %v364 = vshrl.u32 %v363, 7
    %v365 = vsub.s32 5, %v364
    %v366 = vrot.slane %v188, %v365
    %v367 = vmax.f32 %v357, %v366
    %v368 = vmax.f32 %v361, %v366
    %v369 = vsub.f32 %v353, %v367
    %v370 = vsub.f32 %v354, %v368
    %v371 = vmax.f32 %v369, 0.0
    %v372 = vmax.f32 %v370, 0.0
    %v373 = vmul.f32 %v339, %v371
    %v374 = vmul.f32 %v340, %v372
    %376 = vset.pattern.permute.xlu0 0
    %377 = vperm.xlu0 %376, %v295
    %v378 = vpop.permute.xlu0 %377
    %381 = vset.pattern.permute.xlu0 0
    %382 = vperm.xlu0 %381, %v296
    %v383 = vpop.permute.xlu0 %382
    %v385 = vlaneseq
    %v386 = vshrl.u32 %v385, 7
    %v387 = vsub.s32 6, %v386
    %v388 = vrot.slane %v304, %v387
    %v389 = vadd.f32 %v378, %v388
    %v390 = vadd.f32 %v383, %v388
    %v391 = vsub.f32 %v389, %v373
    %v392 = vsub.f32 %v390, %v374
    %v393 = vadd.f32 %v391, 1e-07
    %v394 = vadd.f32 %v392, 1e-07
    %v395 = vrcp.pop %v393
    %v396 = vrcp.pop %v394
    %v397 = vmul.f32 %v373, %v395
    %v398 = vmul.f32 %v374, %v396
    %v399 = vmax.f32 %v308, %v318
    %v400 = vmax.f32 %v313, %v318
    %v401 = vmin.f32 %v324, %v334
    %v402 = vmin.f32 %v329, %v334
    %v403 = vsub.f32 %v399, %v401
    %v404 = vsub.f32 %v400, %v402
    %v405 = vmax.f32 %v403, 0.0
    %v406 = vmax.f32 %v404, 0.0
    %v407 = vmax.f32 %v343, %v352
    %v408 = vmax.f32 %v347, %v352
    %v409 = vmin.f32 %v357, %v366
    %v410 = vmin.f32 %v361, %v366
    %v411 = vsub.f32 %v407, %v409
    %v412 = vsub.f32 %v408, %v410
    %v413 = vmax.f32 %v411, 0.0
    %v414 = vmax.f32 %v412, 0.0
    %v415 = vmul.f32 %v405, %v413
    %v416 = vmul.f32 %v406, %v414
    %v417 = vsub.f32 %v415, %v391
    %v418 = vsub.f32 %v416, %v392
    %v419 = vadd.f32 %v415, 1e-07
    %v420 = vadd.f32 %v416, 1e-07
    %v421 = vrcp.pop %v419
    %v422 = vrcp.pop %v420
    %v423 = vmul.f32 %v417, %v421
    %v424 = vmul.f32 %v418, %v422
    %v425 = vsub.f32 %v397, %v423
    %v426 = vsub.f32 %v398, %v424
    %v427 = vmul.f32 %v425, 2.0
    %v428 = vmul.f32 %v426, 2.0
    %v429 = vsub.f32 %v269, %v427
    %v430 = vsub.f32 %v270, %v428
    %431 = vst [vmem:[#allocation5] sm:$0xff] %v429
    %432 = vst [vmem:[#allocation5 + $0x8] sm:$0xff] %v430
    // Predicated region
    $region22: #{tpu_custom_call.1} parent=1 // pred_check
      _
    $region23: #{tpu_custom_call.1} parent=1 // pred_check_branch
      %434 = sbr.rel (0) target = $region25
    $region24: #{tpu_custom_call.1} parent=1 // pred_region
      %s436 = ssub.s32 256, 256
      %437 = vsyncadd [#allocation4], %s436
      %s438 = sshll.u32 [#allocation5], 4
      %s439 = int_to_ptr.vmem [resolvable:$true] %s438
      %444 = dma.vmem_to_hbm [thread:$0]  %s439, 256, %s4, [#allocation4], 128, 128, 8
    $region25: #{tpu_custom_call.1} parent=1 // pred_fallthru
      _
    // Predicated region
    $region26: #{tpu_custom_call.1} parent=1 // pred_check
      _
    $region27: #{tpu_custom_call.1} parent=1 // pred_check_branch
      %446 = sbr.rel (0) target = $region29
    $region28: #{tpu_custom_call.1} parent=1 // pred_region
      %447 = dma.done [#allocation4], 256
    $region29: #{tpu_custom_call.1} parent=1 // pred_fallthru
      _
    %448 = vsyncpa [#allocation3], 1
    %449 = vsyncpa [#allocation4], 1

</llo_original>
